<compile_context>
chip_gen: v7x
topology: tpu7x:2x2x1
jax: 0.10.0
libtpu: 0.0.40
codegen_flags: <defaults>
</compile_context>

<pallas_src>
import jax
import jax.numpy as jnp
from jax import lax
from jax.experimental import pallas as pl
from jax.experimental.pallas import tpu as pltpu


NUM_BRANCHES = 3
BATCH = 8
D_IN = 32
D_OUT = 32


def concat_table_kernel(x_ref, w_ref, b_ref, *o_refs):
    """Fused ConcatTable-of-Linear forward.

    x_ref:  (BATCH, D_IN)             f32 shared input (cast to bf16 in-kernel)
    w_ref:  (NUM_BRANCHES*D_OUT, D_IN) bf16 branch weights, PyTorch (out, in)
                                       layout, concatenated along out
    b_ref:  (1, NUM_BRANCHES*D_OUT)    f32 concatenated biases
    o_refs: NUM_BRANCHES refs, each (BATCH, D_OUT) f32 per-module output
    """
    # In-kernel bf16 cast of x (VPU, hidden under the MXU push).
    x_bf16 = x_ref[...].astype(jnp.bfloat16)
    # Single MXU pass: contract x's dim 1 with w's dim 1 (PyTorch (out, in)
    # layout -> no transpose needed anywhere). Accumulate in f32.
    acc = lax.dot_general(
        x_bf16, w_ref[...],
        dimension_numbers=(((1,), (1,)), ((), ())),
        preferred_element_type=jnp.float32,
    )
    # f32 bias epilogue (v5e-safe), then write each branch output directly.
    y = acc + b_ref[...]
    d_out = o_refs[0].shape[-1]
    for i, o_ref in enumerate(o_refs):
        o_ref[...] = y[:, i * d_out:(i + 1) * d_out].astype(o_ref.dtype)


def prepare_params(weights, biases):
    """One-time (offline) parameter fusion: run OUTSIDE the hot path.

    weights: (NUM_BRANCHES, D_OUT, D_IN) f32, PyTorch Linear (out, in) layout
    biases:  (NUM_BRANCHES, D_OUT)       f32
    Returns (w_cat_bf16, b_cat_f32) ready for concat_table_forward.
    """
    n, d_out, d_in = weights.shape
    # Free, contiguous reshape (keeps PyTorch (out, in) layout; no transpose).
    w_cat = weights.reshape(n * d_out, d_in).astype(jnp.bfloat16)
    b_cat = biases.reshape(1, n * d_out).astype(jnp.float32)
    return w_cat, b_cat


@jax.jit
def concat_table_forward(x, w_cat, b_cat):
    """Fused ConcatTable of Linear branches (hot path).

    Args:
      x:     (BATCH, D_IN) float32
      w_cat: (NUM_BRANCHES*D_OUT, D_IN) bfloat16   -- from prepare_params
      b_cat: (1, NUM_BRANCHES*D_OUT)   float32     -- from prepare_params
    Returns:
      list of NUM_BRANCHES arrays, each (BATCH, D_OUT)  (ConcatTable semantics)
    """
    batch, d_in = x.shape
    total_out = w_cat.shape[0]
    n = NUM_BRANCHES
    d_out = total_out // n

    vmem = pl.BlockSpec(memory_space=pltpu.MemorySpace.VMEM)
    cost = pl.CostEstimate(
        flops=2 * batch * d_in * total_out,
        transcendentals=0,
        bytes_accessed=(batch * d_in * 4          # x (f32)
                        + total_out * d_in * 2    # W (bf16)
                        + total_out * 4           # b (f32)
                        + n * batch * d_out * 4), # outputs (f32)
    )

    outs = pl.pallas_call(
        concat_table_kernel,
        out_shape=tuple(
            jax.ShapeDtypeStruct((batch, d_out), x.dtype) for _ in range(n)),
        in_specs=[vmem, vmem, vmem],    # no grid: whole arrays resident in VMEM
        out_specs=tuple(vmem for _ in range(n)),
        cost_estimate=cost,
    )(x, w_cat, b_cat)

    # ConcatTable returns a *list* of per-module outputs (already separate
    # kernel outputs -> no wrapper-side slicing).
    return list(outs)


def reference_forward(x, weights, biases):
    # Pure-JAX reference of PyTorch: [Linear_i(x) for i in range(n)]
    return [x @ weights[i].T + biases[i] for i in range(weights.shape[0])]


if __name__ == "__main__":
    key = jax.random.PRNGKey(0)
    kx, kw, kb = jax.random.split(key, 3)

    x = jax.random.normal(kx, (BATCH, D_IN), dtype=jnp.float32)
    # Deterministic parameter init (synthetic; not a checkpoint load)
    weights = jax.random.normal(
        kw, (NUM_BRANCHES, D_OUT, D_IN), dtype=jnp.float32) * 0.05
    biases = jax.random.normal(
        kb, (NUM_BRANCHES, D_OUT), dtype=jnp.float32) * 0.05

    # One-time parameter prep, outside the hot path.
    w_cat, b_cat = prepare_params(weights, biases)
    w_cat, b_cat = jax.block_until_ready(w_cat), jax.block_until_ready(b_cat)

    outs = concat_table_forward(x, w_cat, b_cat)
    outs = [jax.block_until_ready(o) for o in outs]

    refs = reference_forward(x, weights, biases)
    for o, r in zip(outs, refs):
        assert o.shape == (BATCH, D_OUT)
        # bf16 MXU operands w/ f32 accumulation -> relaxed tolerance vs f32 ref
        assert jnp.allclose(o, r, atol=5e-2, rtol=5e-2)

    print("KERNEL_OK")
</pallas_src>

<mosaic_0001>
module attributes {stable_mosaic.version = 11 : i64} {
  func.func @concat_table_kernel(%arg0: memref<8x32xf32, #tpu.memory_space<vmem>>, %arg1: memref<96x32xbf16, #tpu.memory_space<vmem>>, %arg2: memref<1x96xf32, #tpu.memory_space<vmem>>, %arg3: memref<8x32xf32, #tpu.memory_space<vmem>>, %arg4: memref<8x32xf32, #tpu.memory_space<vmem>>, %arg5: memref<8x32xf32, #tpu.memory_space<vmem>>) attributes {dimension_semantics = [], scalar_prefetch = 0 : i64, scratch_operands = 0 : i64, tpu.core_type = #tpu.core_type<tc>} {
    %c0 = arith.constant 0 : index
    %c0_0 = arith.constant 0 : index
    %0 = vector.load %arg0[%c0, %c0_0] : memref<8x32xf32, #tpu.memory_space<vmem>>, vector<8x32xf32>
    %1 = arith.truncf %0 : vector<8x32xf32> to vector<8x32xbf16>
    %c0_1 = arith.constant 0 : index
    %c0_2 = arith.constant 0 : index
    %2 = vector.load %arg1[%c0_1, %c0_2] : memref<96x32xbf16, #tpu.memory_space<vmem>>, vector<96x32xbf16>
    %cst = arith.constant dense<0.000000e+00> : vector<8x96xf32>
    %3 = tpu.matmul %1, %2, %cst {dimension_numbers = #tpu.dot_dimension_numbers<[1], [1], [0], [0], [0, 0, 1, 0], [], []>} : vector<8x32xbf16>, vector<96x32xbf16>, vector<8x96xf32> -> vector<8x96xf32>
    %c0_3 = arith.constant 0 : index
    %c0_4 = arith.constant 0 : index
    %4 = vector.load %arg2[%c0_3, %c0_4] : memref<1x96xf32, #tpu.memory_space<vmem>>, vector<1x96xf32>
    %5 = vector.broadcast %4 : vector<1x96xf32> to vector<8x96xf32>
    %6 = arith.addf %3, %5 : vector<8x96xf32>
    %7 = vector.extract_strided_slice %6 {offsets = [0, 0], sizes = [8, 32], strides = [1, 1]} : vector<8x96xf32> to vector<8x32xf32>
    %c0_5 = arith.constant 0 : index
    %c0_6 = arith.constant 0 : index
    %8 = vector.load %arg3[%c0_5, %c0_6] : memref<8x32xf32, #tpu.memory_space<vmem>>, vector<8x32xf32>
    tpu.vector_store %arg3[%c0_5, %c0_6], %7 {strides = array<i32>} : memref<8x32xf32, #tpu.memory_space<vmem>>, vector<8x32xf32>,
    %9 = vector.extract_strided_slice %6 {offsets = [0, 32], sizes = [8, 32], strides = [1, 1]} : vector<8x96xf32> to vector<8x32xf32>
    %c0_7 = arith.constant 0 : index
    %c0_8 = arith.constant 0 : index
    %10 = vector.load %arg4[%c0_7, %c0_8] : memref<8x32xf32, #tpu.memory_space<vmem>>, vector<8x32xf32>
    tpu.vector_store %arg4[%c0_7, %c0_8], %9 {strides = array<i32>} : memref<8x32xf32, #tpu.memory_space<vmem>>, vector<8x32xf32>,
    %11 = vector.extract_strided_slice %6 {offsets = [0, 64], sizes = [8, 32], strides = [1, 1]} : vector<8x96xf32> to vector<8x32xf32>
    %c0_9 = arith.constant 0 : index
    %c0_10 = arith.constant 0 : index
    %12 = vector.load %arg5[%c0_9, %c0_10] : memref<8x32xf32, #tpu.memory_space<vmem>>, vector<8x32xf32>
    tpu.vector_store %arg5[%c0_9, %c0_10], %11 {strides = array<i32>} : memref<8x32xf32, #tpu.memory_space<vmem>>, vector<8x32xf32>,
    return
  }
}

</mosaic_0001>

<llo_original>
// kernel: concat_table_forward.1
$region0: #{concat_table_forward.1}
  #allocation0 [shape = 'u32[]', space=smem, size = 0x4, offset = 0x4, fixed_abs, tag = 'smem constant byte address 0x4 - core index']
  #allocation1 [shape = 'u32[144,128]{1,0:T(1,128)}', space=vmem, size = 0x12000, scoped, tag = 'internal scratch']
  %s0 = inlined_call_operand.vmem [shape: f32[8,32], index: 0, kind: input, shape index: {}]
  %s1 = inlined_call_operand.vmem [shape: bf16[96,32], index: 1, kind: input, shape index: {}]
  %s2 = inlined_call_operand.vmem [shape: f32[1,96], index: 2, kind: input, shape index: {}]
  %s3 = inlined_call_operand.hbm [shape: f32[8,32], index: 3, kind: output, shape index: {0}]
  %s4 = inlined_call_operand.hbm [shape: f32[8,32], index: 4, kind: output, shape index: {1}]
  %s5 = inlined_call_operand.hbm [shape: f32[8,32], index: 5, kind: output, shape index: {2}]
  %6 = xla_tuple %s3, %s4, %s5
  %s7 = sld [smem:[#allocation0]]
  $region38: #{concat_table_forward.1} parent=0
    _
  %s9 = ssub.s32 1, %s7
  %s10 = scalar_select 0, %s9, %s7
  $region1: #{concat_table_forward.1} parent=0
    #allocation2 [shape = 'u8[4096]{0}', space=vmem, size = 0x1000, scoped, tag = 'output window, operand 0, single buffered']
    #allocation3 [shape = 's32[1]{0}', space=sflag, size = 0x4, scoped, tag = 'scoped memory for concat_table_forward.1']
    #allocation4 [shape = 'u8[4096]{0}', space=vmem, size = 0x1000, scoped, tag = 'output window, operand 1, single buffered']
    #allocation5 [shape = 's32[1]{0}', space=sflag, size = 0x4, scoped, tag = 'scoped memory for concat_table_forward.1']
    #allocation6 [shape = 'u8[4096]{0}', space=vmem, size = 0x1000, scoped, tag = 'output window, operand 2, single buffered']
    %11 = vsyncpa [#allocation3], 0
    %12 = vsyncpa [#allocation5], 0
    // Predicated region
    $region2: #{concat_table_forward.1} parent=1 // pred_check
      _
    $region3: #{concat_table_forward.1} parent=1 // pred_check_branch
      %14 = sbr.rel (0) target = $region5
    $region4: #{concat_table_forward.1} parent=1 // pred_region
      _
    $region5: #{concat_table_forward.1} parent=1 // pred_fallthru
      _
    // Predicated region
    $region6: #{concat_table_forward.1} parent=1 // pred_check
      _
    $region7: #{concat_table_forward.1} parent=1 // pred_check_branch
      %16 = sbr.rel (0) target = $region9
    $region8: #{concat_table_forward.1} parent=1 // pred_region
      _
    $region9: #{concat_table_forward.1} parent=1 // pred_fallthru
      _
    // Predicated region
    $region10: #{concat_table_forward.1} parent=1 // pred_check
      _
    $region11: #{concat_table_forward.1} parent=1 // pred_check_branch
      %18 = sbr.rel (0) target = $region13
    $region12: #{concat_table_forward.1} parent=1 // pred_region
      _
    $region13: #{concat_table_forward.1} parent=1 // pred_fallthru
      _
    %v20 = vld [vmem:[%s0] sm:$0xff]
    %v21 = vpack.c.bf16 %v20, %v20
    %v22 = vld [vmem:[%s1] sm:$0xf]
    %v23 = vld [vmem:[%s1 + $0x4] sm:$0xf]
    %v24 = vld [vmem:[%s1 + $0x8] sm:$0xf]
    %v25 = vld [vmem:[%s1 + $0xc] sm:$0xf]
    %v26 = vld [vmem:[%s1 + $0x10] sm:$0xf]
    %v27 = vld [vmem:[%s1 + $0x14] sm:$0xf]
    %v28 = vld [vmem:[%s1 + $0x18] sm:$0xf]
    %v29 = vld [vmem:[%s1 + $0x1c] sm:$0xf]
    %v30 = vld [vmem:[%s1 + $0x20] sm:$0xf]
    %v31 = vld [vmem:[%s1 + $0x24] sm:$0xf]
    %v32 = vld [vmem:[%s1 + $0x28] sm:$0xf]
    %v33 = vld [vmem:[%s1 + $0x2c] sm:$0xf]
    %v34 = vld [vmem:[%s2] sm:$0x1]
    %v36 = vlaneseq
    %v37 = vshrl.u32 %v36, 7
    %v38 = vsub.s32 0, %v37
    %v39 = vrot.slane %v34, %v38
    %v53 = vunpack.c.l.b16 %v22
    %v54 = vunpack.c.l.b16 %v23
    %v55 = vunpack.c.l.b16 %v24
    %v56 = vunpack.c.l.b16 %v25
    %v57 = vunpack.c.l.b16 %v26
    %v58 = vunpack.c.l.b16 %v27
    %v59 = vunpack.c.l.b16 %v28
    %v60 = vunpack.c.l.b16 %v29
    %v61 = vunpack.c.l.b16 %v30
    %v62 = vunpack.c.l.b16 %v31
    %v63 = vunpack.c.l.b16 %v32
    %v64 = vunpack.c.l.b16 %v33
    %v65 = vpack.c.b16 %v54, %v53
    %v66 = vpack.c.b16 %v56, %v55
    %v67 = vpack.c.b16 %v58, %v57
    %v68 = vpack.c.b16 %v60, %v59
    %v69 = vpack.c.b16 %v62, %v61
    %v70 = vpack.c.b16 %v64, %v63
    %vm71 = vcmask 261120
    %v73 = vsel %vm71, %v21, 0
    %v76 = vsel %vm71, %v65, 0
    %v79 = vsel %vm71, %v66, 0
    %v82 = vsel %vm71, %v67, 0
    %v85 = vsel %vm71, %v68, 0
    %v88 = vsel %vm71, %v69, 0
    %v91 = vsel %vm71, %v70, 0
    %93 = vmatprep.subr.bf16.mxu0 0
    %94 = vmatpush1.bf16.xpose.msra.mxu0 %v76
    %95 = vmatprep.subr.bf16.mxu0 0
    %96 = vmatpush1.bf16.xpose.msra.mxu0 %v79
    %97 = vmatprep.subr.bf16.mxu0 0
    %98 = vmatpush1.bf16.xpose.msra.mxu0 %v82
    %99 = vmatprep.subr.bf16.mxu0 0
    %100 = vmatpush1.bf16.xpose.msra.mxu0 %v85
    %101 = vmatprep.subr.bf16.mxu0 0
    %102 = vmatpush1.bf16.xpose.msra.mxu0 %v88
    %103 = vmatprep.subr.bf16.mxu0 0
    %104 = vmatpush1.bf16.xpose.msra.mxu0 %v91
    %105 = vmatprep.subr.bf16.mxu0 0
    %106 = vmatpush1.bf16.xpose.msra.mxu0 0
    %107 = vmatprep.subr.bf16.mxu0 0
    %108 = vmatpush1.bf16.xpose.msra.mxu0 0
    %109 = vmatprep.subr.bf16.mxu0 0
    %110 = vmatpush1.bf16.xpose.msra.mxu0 0
    %111 = vmatprep.subr.bf16.mxu0 0
    %112 = vmatpush1.bf16.xpose.msra.mxu0 0
    %113 = vmatprep.subr.bf16.mxu0 0
    %114 = vmatpush1.bf16.xpose.msra.mxu0 0
    %115 = vmatprep.subr.bf16.mxu0 0
    %116 = vmatpush1.bf16.xpose.msra.mxu0 0
    %117 = vmatprep.subr.bf16.mxu0 0
    %118 = vmatpush1.bf16.xpose.msra.mxu0 0
    %119 = vmatprep.subr.bf16.mxu0 0
    %120 = vmatpush1.bf16.xpose.msra.mxu0 0
    %121 = vmatprep.subr.bf16.mxu0 0
    %122 = vmatpush1.bf16.xpose.msra.mxu0 0
    %123 = vmatprep.subr.bf16.mxu0 0
    %124 = vmatpush1.bf16.xpose.msra.mxu0 0
    %125 = vmatprep.mubr.bf16.mxu0 0
    %126 = vmatmul.mubr.bf16.gmra.mrb[0].mxu0 %v73
    %v127 = vpop.f32.mrb[0].mxu0
    %v128 = vadd.f32 %v39, %v127
    %v129 = vpop.f32.mrb[0].mxu0
    %v130 = vpop.f32.mrb[0].mxu0
    %v131 = vpop.f32.mrb[0].mxu0
    %132 = vdwg.mxu0
    %133 = vst.msk [vmem:[#allocation2] sm:$0xff] %vm71, %v128
    %135 = vrot.lane.b32.xlu0 %v128, 96
    %v136 = vpop.permute.xlu0 %135
    %138 = vst.msk [vmem:[#allocation4] sm:$0xff] %vm71, %v136
    %139 = vrot.lane.b32.xlu0 %v128, 64
    %v140 = vpop.permute.xlu0 %139
    %142 = vst.msk [vmem:[#allocation6] sm:$0xff] %vm71, %v140
    // Predicated region
    $region14: #{concat_table_forward.1} parent=1 // pred_check
      _
    $region15: #{concat_table_forward.1} parent=1 // pred_check_branch
      %144 = sbr.rel (0) target = $region17
    $region16: #{concat_table_forward.1} parent=1 // pred_region
      %s146 = ssub.s32 128, 128
      %147 = vsyncadd [#allocation3], %s146
      %s149 = sshll.u32 [#allocation2], 4
      %s150 = int_to_ptr.vmem [resolvable:$true] %s149
      %152 = dma.vmem_to_hbm [thread:$0]  %s150, 128, %s3, [#allocation3]
    $region17: #{concat_table_forward.1} parent=1 // pred_fallthru
      _
    // Predicated region
    $region18: #{concat_table_forward.1} parent=1 // pred_check
      _
    $region19: #{concat_table_forward.1} parent=1 // pred_check_branch
      %154 = sbr.rel (0) target = $region21
    $region20: #{concat_table_forward.1} parent=1 // pred_region
      %s156 = ssub.s32 128, 128
      %157 = vsyncadd [#allocation5], %s156
      %s159 = sshll.u32 [#allocation4], 4
      %s160 = int_to_ptr.vmem [resolvable:$true] %s159
      %162 = dma.vmem_to_hbm [thread:$0]  %s160, 128, %s4, [#allocation5]
    $region21: #{concat_table_forward.1} parent=1 // pred_fallthru
      _
    // Predicated region
    $region22: #{concat_table_forward.1} parent=1 // pred_check
      _
    $region23: #{concat_table_forward.1} parent=1 // pred_check_branch
      %164 = sbr.rel (0) target = $region25
    $region24: #{concat_table_forward.1} parent=1 // pred_region
      %s166 = ssub.s32 128, 128
      %167 = vsyncadd [#allocation5], %s166
      %s169 = sshll.u32 [#allocation6], 4
      %s170 = int_to_ptr.vmem [resolvable:$true] %s169
      %172 = dma.vmem_to_hbm [thread:$0]  %s170, 128, %s5, [#allocation5]
    $region25: #{concat_table_forward.1} parent=1 // pred_fallthru
      _
    // Predicated region
    $region26: #{concat_table_forward.1} parent=1 // pred_check
      _
    $region27: #{concat_table_forward.1} parent=1 // pred_check_branch
      %174 = sbr.rel (0) target = $region29
    $region28: #{concat_table_forward.1} parent=1 // pred_region
      %175 = dma.done [#allocation3], 128
    $region29: #{concat_table_forward.1} parent=1 // pred_fallthru
      _
    // Predicated region
    $region30: #{concat_table_forward.1} parent=1 // pred_check
      _
    $region31: #{concat_table_forward.1} parent=1 // pred_check_branch
      %177 = sbr.rel (0) target = $region33
    $region32: #{concat_table_forward.1} parent=1 // pred_region
      %178 = dma.done [#allocation5], 128
    $region33: #{concat_table_forward.1} parent=1 // pred_fallthru
      _
    // Predicated region
    $region34: #{concat_table_forward.1} parent=1 // pred_check
      _
    $region35: #{concat_table_forward.1} parent=1 // pred_check_branch
      %180 = sbr.rel (0) target = $region37
    $region36: #{concat_table_forward.1} parent=1 // pred_region
      %181 = dma.done [#allocation5], 128
    $region37: #{concat_table_forward.1} parent=1 // pred_fallthru
      _
    %182 = vsyncpa [#allocation3], 1
    %183 = vsyncpa [#allocation5], 1

</llo_original>
